<compile_context>
chip_gen: v5e
topology: v5e:2x2
jax: 0.10.0
libtpu: 0.0.40
codegen_flags: <defaults>
</compile_context>

<pallas_src>
import numpy as np
import jax
import jax.numpy as jnp
from jax.experimental import pallas as pl
from jax.experimental.pallas import tpu as pltpu


def length_regulator_kernel(max_total_ref, cs_ref, total_ref, out_ref):
    """One (B, TJ) output tile of the length regulator.

    max_total_ref: SMEM (1,)  int32  max over batch of total output frames
    cs_ref:        (B, T)     int32  inclusive cumsum of masked durations;
                                     invalid tokens hold INT32_MAX sentinel
    total_ref:     (B, 1)     int32  total output frames per batch row
    out_ref:       (B, TJ)    int32  mel2ph tile (1-based token id, 0 = pad)
    """
    TJ = out_ref.shape[1]
    tile_start = pl.program_id(0) * TJ

    @pl.when(tile_start >= max_total_ref[0])
    def _():
        # Tile lies entirely in the padding region of every batch row.
        out_ref[...] = jnp.zeros_like(out_ref)

    @pl.when(tile_start < max_total_ref[0])
    def _():
        cs = cs_ref[...]                      # (B, T)
        total = total_ref[...]                # (B, 1)
        # Per-tile output-frame indices (lane-dense, built once per tile).
        j = tile_start + jax.lax.broadcasted_iota(jnp.int32, (1, TJ), 1)  # (1, TJ)
        # counts[b, j] = #{ t : cs[b, t] <= j }  (sentinel rows never count)
        counts = jnp.sum(
            (cs[:, :, None] <= j[:, None, :]).astype(jnp.int32), axis=1
        )                                      # (B, TJ)
        out_ref[...] = jnp.where(j < total, counts + 1, 0)


def _round_up(x, m):
    return ((x + m - 1) // m) * m


def length_regulator(ds, ilens, alpha=1.0, max_len=None):
    """JAX wrapper mirroring LengthRegulator.forward(ds, ilens, alpha, max_len).

    `max_len` must be supplied (static output length) — JAX needs static shapes.
    """
    assert alpha > 0
    ds = jnp.asarray(ds)
    if alpha != 1.0:
        ds = jnp.round(ds.astype(jnp.float32) * alpha)
    ds = ds.astype(jnp.int32)
    if max_len is None:
        raise ValueError("max_len must be provided (static output length).")
    # TODO(synk): if max_len < true max expanded length, frames are clipped
    # (torch's pad_list would size the output to the longest row instead).

    B, T = ds.shape
    ilens2 = jnp.asarray(ilens).astype(jnp.int32).reshape(B, 1)

    # --- cheap (B, T) preprocessing in plain JAX (hoisted out of the kernel) ---
    t_idx = jax.lax.broadcasted_iota(jnp.int32, (B, T), 1)
    valid = t_idx < ilens2
    d_masked = jnp.where(valid, ds, 0)
    # PyTorch fallback: rows whose valid durations sum to 0 are filled with 1s.
    row_total = jnp.sum(d_masked, axis=1, keepdims=True)
    d_masked = jnp.where((row_total == 0) & valid, 1, d_masked)

    cs = jnp.cumsum(d_masked, axis=1)                         # inclusive cumsum
    total = jnp.sum(d_masked, axis=1, keepdims=True).astype(jnp.int32)   # (B, 1)
    # Sentinel on invalid tokens so the kernel needs no per-element valid mask.
    cs_masked = jnp.where(valid, cs, jnp.iinfo(jnp.int32).max).astype(jnp.int32)
    max_total = jnp.max(total).reshape(1).astype(jnp.int32)   # (1,) -> SMEM

    # --- tile the output-frame axis: lane-dense, multiple-of-128 blocks -------
    # Grow TJ while the (B, T, TJ) int32 compare temp stays well under the
    # default scoped-VMEM limits on every TPU generation (<= ~4 MiB).
    # TODO(synk): for very large T, additionally chunk T with an in-kernel
    # accumulation loop; typical FastSpeech T makes this unnecessary.
    TJ = 128
    max_len_128 = _round_up(max(max_len, 1), 128)
    while TJ < 2048 and TJ < max_len_128 and B * T * (TJ * 2) * 4 <= (4 << 20):
        TJ *= 2
    padded_len = _round_up(max(max_len, 1), TJ)
    grid = (padded_len // TJ,)

    out_padded = pl.pallas_call(
        length_regulator_kernel,
        out_shape=jax.ShapeDtypeStruct((B, padded_len), jnp.int32),
        grid_spec=pltpu.PrefetchScalarGridSpec(
            num_scalar_prefetch=1,
            grid=grid,
            in_specs=[
                pl.BlockSpec((B, T), lambda j, mt: (0, 0)),   # cs (whole, resident)
                pl.BlockSpec((B, 1), lambda j, mt: (0, 0)),   # total (whole)
            ],
            out_specs=pl.BlockSpec((B, TJ), lambda j, mt: (0, j)),
        ),
        compiler_params=pltpu.CompilerParams(
            dimension_semantics=("parallel",),
        ),
    )(max_total, cs_masked, total)

    return out_padded[:, :max_len]


def _reference_length_regulator(ds_np, ilens_np, max_len):
    """Pure-numpy replica of the PyTorch forward (for correctness check)."""
    B, T = ds_np.shape
    out = np.zeros((B, max_len), dtype=np.int32)
    for b in range(B):
        d = ds_np[b, : int(ilens_np[b])].astype(np.int64).copy()
        if d.size > 0 and d.sum() == 0:
            d[:] = 1
        frames = []
        for t, dt in enumerate(d):
            frames.extend([t + 1] * int(dt))
        L = min(len(frames), max_len)
        out[b, :L] = np.asarray(frames[:max_len], dtype=np.int32)
    return out


if __name__ == "__main__":
    key = jax.random.PRNGKey(0)
    B, T = 2, 8
    ds = jax.random.randint(key, (B, T), 0, 5, dtype=jnp.int32)   # durations in [0, 4]
    ilens = jnp.array([8, 5], dtype=jnp.int32)

    ds_np = np.asarray(ds)
    ilens_np = np.asarray(ilens)

    # max output length = longest expanded sequence (what pad_list computes),
    # including the all-zero-row fallback.
    totals = []
    for b in range(B):
        d = ds_np[b, : int(ilens_np[b])].copy()
        if d.size > 0 and d.sum() == 0:
            d[:] = 1
        totals.append(int(d.sum()))
    max_len = max(totals)

    out = length_regulator(ds, ilens, alpha=1.0, max_len=max_len)
    out = jax.block_until_ready(out)

    ref = _reference_length_regulator(ds_np, ilens_np, max_len)
    np.testing.assert_array_equal(np.asarray(out), ref)
    print("KERNEL_OK")
</pallas_src>

<mosaic_0001>
module attributes {stable_mosaic.version = 11 : i64} {
  func.func @length_regulator_kernel(%arg0: i32, %arg1: memref<1xi32, #tpu.memory_space<smem>>, %arg2: memref<2x8xi32, #tpu.memory_space<vmem>>, %arg3: memref<2x1xi32, #tpu.memory_space<vmem>>, %arg4: memref<2x128xi32, #tpu.memory_space<vmem>>) attributes {dimension_semantics = [#tpu.dimension_semantics<parallel>], iteration_bounds = array<i64: 1>, scalar_prefetch = 1 : i64, scratch_operands = 0 : i64, tpu.core_type = #tpu.core_type<tc>, window_params = [{pipeline_mode = #tpu.pipeline_mode<synchronous>, transform_indices = @transform_0, window_bounds = array<i64: 2, 8>}, {pipeline_mode = #tpu.pipeline_mode<synchronous>, transform_indices = @transform_1, window_bounds = array<i64: 2, 1>}, {transform_indices = @transform_2, window_bounds = array<i64: 2, 128>}]} {
    %c128_i32 = arith.constant 128 : i32
    %0 = arith.muli %arg0, %c128_i32 : i32
    %c0 = arith.constant 0 : index
    %1 = memref.load %arg1[%c0] : memref<1xi32, #tpu.memory_space<smem>>
    %2 = arith.cmpi sge, %0, %1 : i32
    %3 = arith.extui %2 : i1 to i32
    %c0_i32 = arith.constant 0 : i32
    %4 = arith.cmpi ne, %3, %c0_i32 : i32
    scf.if %4 {
      %c0_i32_2 = arith.constant 0 : i32
      %9 = vector.broadcast %c0_i32_2 : i32 to vector<2x128xi32>
      %c0_3 = arith.constant 0 : index
      %c0_4 = arith.constant 0 : index
      %10 = vector.load %arg4[%c0_3, %c0_4] : memref<2x128xi32, #tpu.memory_space<vmem>>, vector<2x128xi32>
      tpu.vector_store %arg4[%c0_3, %c0_4], %9 {strides = array<i32>} : memref<2x128xi32, #tpu.memory_space<vmem>>, vector<2x128xi32>,
    } else {
    }
    %c0_0 = arith.constant 0 : index
    %5 = memref.load %arg1[%c0_0] : memref<1xi32, #tpu.memory_space<smem>>
    %6 = arith.cmpi slt, %0, %5 : i32
    %7 = arith.extui %6 : i1 to i32
    %c0_i32_1 = arith.constant 0 : i32
    %8 = arith.cmpi ne, %7, %c0_i32_1 : i32
    scf.if %8 {
      %c0_2 = arith.constant 0 : index
      %c0_3 = arith.constant 0 : index
      %9 = vector.load %arg2[%c0_2, %c0_3] : memref<2x8xi32, #tpu.memory_space<vmem>>, vector<2x8xi32>
      %c0_4 = arith.constant 0 : index
      %c0_5 = arith.constant 0 : index
      %10 = vector.load %arg3[%c0_4, %c0_5] : memref<2x1xi32, #tpu.memory_space<vmem>>, vector<2x1xi32>
      %11 = tpu.iota {dimensions = array<i32: 1>} : vector<1x128xi32>
      %12 = vector.broadcast %0 : i32 to vector<1x128xi32>
      %13 = arith.addi %12, %11 : vector<1x128xi32>
      %14 = vector.shape_cast %9 : vector<2x8xi32> to vector<2x8x1xi32>
      %15 = vector.shape_cast %13 : vector<1x128xi32> to vector<1x1x128xi32>
      %16 = vector.broadcast %14 : vector<2x8x1xi32> to vector<2x8x128xi32>
      %17 = vector.broadcast %15 : vector<1x1x128xi32> to vector<2x8x128xi32>
      %18 = arith.cmpi sle, %16, %17 : vector<2x8x128xi32>
      %19 = arith.extui %18 : vector<2x8x128xi1> to vector<2x8x128xi32>
      %cst = arith.constant dense<0> : vector<2x128xi32>
      %20 = vector.multi_reduction <add>, %19, %cst [1] : vector<2x8x128xi32> to vector<2x128xi32>
      %21 = vector.broadcast %13 : vector<1x128xi32> to vector<2x128xi32>
      %22 = vector.broadcast %10 : vector<2x1xi32> to vector<2x128xi32>
      %23 = arith.cmpi slt, %21, %22 : vector<2x128xi32>
      %c1_i32 = arith.constant 1 : i32
      %24 = vector.broadcast %c1_i32 : i32 to vector<2x128xi32>
      %25 = arith.addi %20, %24 : vector<2x128xi32>
      %c0_i32_6 = arith.constant 0 : i32
      %26 = vector.broadcast %c0_i32_6 : i32 to vector<2x128xi32>
      %27 = arith.select %23, %25, %26 : vector<2x128xi1>, vector<2x128xi32>
      %c0_7 = arith.constant 0 : index
      %c0_8 = arith.constant 0 : index
      %28 = vector.load %arg4[%c0_7, %c0_8] : memref<2x128xi32, #tpu.memory_space<vmem>>, vector<2x128xi32>
      tpu.vector_store %arg4[%c0_7, %c0_8], %27 {strides = array<i32>} : memref<2x128xi32, #tpu.memory_space<vmem>>, vector<2x128xi32>,
    } else {
    }
    return
  }
  func.func @transform_0(%arg0: i32, %arg1: memref<1xi32, #tpu.memory_space<smem>>) -> (i32, i32) {
    %c0_i32 = arith.constant 0 : i32
    %c0_i32_0 = arith.constant 0 : i32
    %c0_i32_1 = arith.constant 0 : i32
    return %c0_i32, %c0_i32_0 : i32, i32
  }
  func.func @transform_1(%arg0: i32, %arg1: memref<1xi32, #tpu.memory_space<smem>>) -> (i32, i32) {
    %c0_i32 = arith.constant 0 : i32
    %c0_i32_0 = arith.constant 0 : i32
    %c0_i32_1 = arith.constant 0 : i32
    return %c0_i32, %c0_i32_0 : i32, i32
  }
  func.func @transform_2(%arg0: i32, %arg1: memref<1xi32, #tpu.memory_space<smem>>) -> (i32, i32) {
    %c0_i32 = arith.constant 0 : i32
    %c0_i32_0 = arith.constant 0 : i32
    return %c0_i32, %arg0 : i32, i32
  }
}

</mosaic_0001>

<llo_original>
// kernel: tpu_custom_call.1
$region0: #{tpu_custom_call.1}
  #allocation0 [shape = 'u32[]', space=smem, size = 0x4, offset = 0x4, fixed_abs, tag = 'smem constant byte address 0x4 - core index']
  #allocation1 [shape = 'u32[72,128]{1,0:T(1,128)}', space=vmem, size = 0x9000, scoped, tag = 'internal scratch']
  #allocation2 [shape = 's32[1]{0}', space=sflag, size = 0x4, scoped, tag = 'scoped memory for tpu_custom_call.1']
  #allocation3 [shape = 's32[1]{0:T(128)S(6)}', space=smem, size = 0x200, scoped, tag = 'prefetched SMEM operand 0']
  %s0 = inlined_call_operand.<no memory space> [shape: s32[1], index: 0, kind: input, shape index: {}]
  %s1 = inlined_call_operand.vmem [shape: s32[2,8], index: 1, kind: input, shape index: {}]
  %s2 = inlined_call_operand.vmem [shape: s32[2,1], index: 2, kind: input, shape index: {}]
  %s3 = inlined_call_operand.hbm [shape: s32[2,128], index: 3, kind: output, shape index: {}]
  %s4 = sld [smem:[#allocation0]]
  $region26: #{tpu_custom_call.1} parent=0
    _
  %s6 = ssub.s32 1, %s4
  %s7 = scalar_select 0, %s6, %s4
  %8 = sst [smem:[#allocation3]] %s0
  $region1: #{tpu_custom_call.1} parent=0
    #allocation4 [shape = 'u8[1024]{0}', space=vmem, size = 0x400, scoped, tag = 'output window, operand 0, single buffered']
    #allocation5 [shape = 's32[1]{0}', space=sflag, size = 0x4, scoped, tag = 'scoped memory for tpu_custom_call.1']
    %9 = vsyncpa [#allocation5], 0
    // Predicated region
    $region2: #{tpu_custom_call.1} parent=1 // pred_check
      _
    $region3: #{tpu_custom_call.1} parent=1 // pred_check_branch
      %11 = sbr.rel (0) target = $region5
    $region4: #{tpu_custom_call.1} parent=1 // pred_region
      _
    $region5: #{tpu_custom_call.1} parent=1 // pred_fallthru
      _
    // Predicated region
    $region6: #{tpu_custom_call.1} parent=1 // pred_check
      _
    $region7: #{tpu_custom_call.1} parent=1 // pred_check_branch
      %13 = sbr.rel (0) target = $region9
    $region8: #{tpu_custom_call.1} parent=1 // pred_region
      _
    $region9: #{tpu_custom_call.1} parent=1 // pred_fallthru
      _
    %s14 = smul.u32 0, 128
    %s15 = sld [smem:[#allocation3]]
    %p16 = scmp.ge.s32.totalorder %s14, %s15
    // Predicated region
    $region10: #{tpu_custom_call.1} parent=1 // pred_check
      %p17 = pneg %p16
    $region11: #{tpu_custom_call.1} parent=1 // pred_check_branch
      %19 = sbr.rel (%p17) target = $region13
    $region12: #{tpu_custom_call.1} parent=1 // pred_region
      %20 = vst [vmem:[#allocation4] sm:$0x3] 0
    $region13: #{tpu_custom_call.1} parent=1 // pred_fallthru
      _
    %s21 = sld [smem:[#allocation3]]
    %p22 = scmp.lt.s32.totalorder %s14, %s21
    // Predicated region
    $region14: #{tpu_custom_call.1} parent=1 // pred_check
      %p23 = pneg %p22
    $region15: #{tpu_custom_call.1} parent=1 // pred_check_branch
      %25 = sbr.rel (%p23) target = $region17
    $region16: #{tpu_custom_call.1} parent=1 // pred_region
      %v26 = vld [vmem:[%s1] sm:$0x3]
      %v27 = vld [vmem:[%s2] sm:$0x3]
      %v28 = vlaneseq
      %v29 = vand.u32 %v28, 127
      %v30 = vstv %s14
      %v31 = vadd.s32 %v30, %v29
      %v32 = vperm.slane %v26, 0
      %v33 = vlaneseq
      %v34 = vshrl.u32 %v33, 7
      %36 = vset.pattern.permute.xlu0 %v34
      %37 = vperm.xlu0 %36, %v32
      %v38 = vpop.permute.xlu0 %37
      %v39 = vperm.slane %v26, 1
      %v40 = vlaneseq
      %v41 = vshrl.u32 %v40, 7
      %43 = vset.pattern.permute.xlu0 %v41
      %44 = vperm.xlu0 %43, %v39
      %v45 = vpop.permute.xlu0 %44
      %vm46 = vcmp.le.s32.totalorder %v38, %v31
      %vm47 = vcmp.le.s32.totalorder %v45, %v31
      %v48 = vsel %vm46, 1, 0
      %v49 = vsel %vm47, 1, 0
      %v50 = vrot.slane %v48, 4
      %v51 = vadd.s32 %v48, %v50
      %v52 = vrot.slane %v51, 2
      %v53 = vadd.s32 %v51, %v52
      %v54 = vrot.slane %v53, 1
      %v55 = vadd.s32 %v53, %v54
      %v56 = vrot.slane %v49, 4
      %v57 = vadd.s32 %v49, %v56
      %v58 = vrot.slane %v57, 2
      %v59 = vadd.s32 %v57, %v58
      %v60 = vrot.slane %v59, 1
      %v61 = vadd.s32 %v59, %v60
      %62 = vset.pattern.permute.xlu0 0
      %63 = vperm.xlu0 %62, %v27
      %v64 = vpop.permute.xlu0 %63
      %vm65 = vcmp.lt.s32.totalorder %v31, %v64
      %v66 = vadd.s32 %v55, 1
      %v67 = vadd.s32 %v61, 1
      %vm68 = vcmask 1041409
      %v69 = vsel %vm68, %v67, %v66
      %v70 = vsel %vm65, %v69, 0
      %71 = vst [vmem:[#allocation4] sm:$0x3] %v70
    $region17: #{tpu_custom_call.1} parent=1 // pred_fallthru
      _
    // Predicated region
    $region18: #{tpu_custom_call.1} parent=1 // pred_check
      _
    $region19: #{tpu_custom_call.1} parent=1 // pred_check_branch
      %73 = sbr.rel (0) target = $region21
    $region20: #{tpu_custom_call.1} parent=1 // pred_region
      %75 = vsyncadd [#allocation5], 0
      %s77 = sshll.u32 [#allocation4], 4
      %s78 = int_to_ptr.vmem [resolvable:$true] %s77
      %s79 = sshll.u32 %s3, 4
      %s80 = int_to_ptr.hbm [resolvable:$true] %s79
      %82 = dma.vmem_to_hbm [thread:$0]  %s78, 32, %s80, [#allocation5]
    $region21: #{tpu_custom_call.1} parent=1 // pred_fallthru
      _
    // Predicated region
    $region22: #{tpu_custom_call.1} parent=1 // pred_check
      _
    $region23: #{tpu_custom_call.1} parent=1 // pred_check_branch
      %84 = sbr.rel (0) target = $region25
    $region24: #{tpu_custom_call.1} parent=1 // pred_region
      %86 = dma.done [#allocation5], 32
    $region25: #{tpu_custom_call.1} parent=1 // pred_fallthru
      _
    %87 = vsyncpa [#allocation5], 1

</llo_original>
